<compile_context>
chip_gen: v5e
topology: v5e:2x2
jax: 0.10.0
libtpu: 0.0.40
codegen_flags: <defaults>
</compile_context>

<pallas_src>
import jax
import jax.numpy as jnp
from jax.experimental import pallas as pl
from jax.experimental.pallas import tpu as pltpu

_LANE = 128          # lane width: batch tile must be a multiple of this
_TB_MAX = 32768      # max batch rows per grid step (~1.4 MB real input payload)
_TB_CAP = None       # lazily derived per-generation cap


def _cdiv(a, b):
    return -(-a // b)


def _round_up(x, m):
    return _cdiv(x, m) * m


def _tile_cap():
    """Max batch-tile (lanes) that fits comfortably in this chip's VMEM."""
    global _TB_CAP
    if _TB_CAP is None:
        # Lane-padded VMEM cost per batch row in the feature-major layout:
        #   x block : 11 -> 16 sublanes * 4 B
        #   out blk :  3 ->  8 sublanes * 4 B
        # each double-buffered by the BlockSpec pipeline => 192 B per row.
        bytes_per_row = 2 * (16 + 8) * 4
        try:
            vmem = pltpu.get_tpu_info().vmem_capacity_bytes
        except Exception:  # pragma: no cover - conservative fallback
            vmem = 64 * 1024 * 1024
        # Use at most a quarter of physical VMEM (and never more than 24 MiB)
        # for the streamed blocks; weights/biases are negligible.
        budget = min(vmem // 4, 24 * 1024 * 1024)
        cap = max(_LANE, (budget // bytes_per_row) // _LANE * _LANE)
        _TB_CAP = min(_TB_MAX, cap)
    return _TB_CAP


def _critic_kernel(xt_ref, w1_ref, b1_ref, w2_ref, b2_ref, w3_ref, b3_ref, ot_ref):
    # Feature-major: activations are (features, TB), batch on the lane axis.
    x = xt_ref[...]                                                  # (11, TB)

    # Layer 1: Linear(11 -> 10), Dropout (identity), ReLU
    h = jnp.dot(w1_ref[...], x, preferred_element_type=jnp.float32)  # (10, TB)
    h = jnp.maximum(h + b1_ref[...], 0.0)
    # Layer 2: Linear(10 -> 9), Dropout (identity), ReLU
    h = jnp.dot(w2_ref[...], h, preferred_element_type=jnp.float32)  # (9, TB)
    h = jnp.maximum(h + b2_ref[...], 0.0)
    # Layer 3: Linear(9 -> 3), Dropout (identity), ReLU
    h = jnp.dot(w3_ref[...], h, preferred_element_type=jnp.float32)  # (3, TB)
    h = jnp.maximum(h + b3_ref[...], 0.0)

    ot_ref[...] = h.astype(ot_ref.dtype)                             # lane-dense store


@jax.jit
def critic_net_forward(x, params):
    """x: (batch, inputSize) float32. params: dict of (w1,b1,w2,b2,w3,b3)."""
    w1, b1, w2, b2, w3, b3 = (params[k] for k in ("w1", "b1", "w2", "b2", "w3", "b3"))
    batch, in_dim = x.shape
    d1, d2, d3 = w1.shape[1], w2.shape[1], w3.shape[1]

    # --- batch tiling (all static, trace-time Python) ---------------------
    tb_cap = _tile_cap()
    batch_p = _round_up(batch, _LANE)
    # >=2 grid steps for any non-trivial batch so both v7x TensorCores work;
    # otherwise as many (even-sized, 128-aligned) steps as VMEM requires.
    n_steps = max(_cdiv(batch_p, tb_cap), 2 if batch_p >= 2 * _LANE else 1)
    tb = _round_up(_cdiv(batch_p, n_steps), _LANE)
    n_steps = _cdiv(batch_p, tb)
    batch_p = n_steps * tb

    # --- feature-major operands -------------------------------------------
    x32 = x.astype(jnp.float32)
    xt = jnp.pad(x32, ((0, batch_p - batch), (0, 0))).T          # (in_dim, batch_p)
    w1t, w2t, w3t = w1.T, w2.T, w3.T                              # (out, in)
    b1c, b2c, b3c = b1.reshape(d1, 1), b2.reshape(d2, 1), b3.reshape(d3, 1)

    def resident(shape):
        # Full-extent block, same tile every grid step -> stays VMEM-resident.
        return pl.BlockSpec(shape, lambda i: (0, 0))

    out_t = pl.pallas_call(
        _critic_kernel,
        out_shape=jax.ShapeDtypeStruct((d3, batch_p), jnp.float32),
        grid=(n_steps,),
        in_specs=[
            pl.BlockSpec((in_dim, tb), lambda i: (0, i)),  # x streams, lane-dense DMA
            resident((d1, in_dim)),                        # w1^T
            resident((d1, 1)),                             # b1 (column -> lane bcast)
            resident((d2, d1)),                            # w2^T
            resident((d2, 1)),                             # b2
            resident((d3, d2)),                            # w3^T
            resident((d3, 1)),                             # b3
        ],
        out_specs=pl.BlockSpec((d3, tb), lambda i: (0, i)),
        compiler_params=pltpu.CompilerParams(
            dimension_semantics=("parallel",),
            vmem_limit_bytes=32 * 1024 * 1024,
        ),
    )(xt, w1t, b1c, w2t, b2c, w3t, b3c)

    # Back to the module's (batch, 3) layout; cheap 12 B/row XLA transpose.
    return out_t[:, :batch].T


def init_params(key, input_size=11, enc1=10, enc2=9, enc_out=3):
    """PyTorch nn.Linear default init: U[-1/sqrt(fan_in), +1/sqrt(fan_in)]."""
    keys = jax.random.split(key, 6)

    def lin(kw, kb, fan_in, fan_out):
        bound = 1.0 / jnp.sqrt(jnp.float32(fan_in))
        w = jax.random.uniform(kw, (fan_in, fan_out), jnp.float32, -bound, bound)
        b = jax.random.uniform(kb, (fan_out,), jnp.float32, -bound, bound)
        return w, b

    w1, b1 = lin(keys[0], keys[1], input_size, enc1)
    w2, b2 = lin(keys[2], keys[3], enc1, enc2)
    w3, b3 = lin(keys[4], keys[5], enc2, enc_out)
    return {"w1": w1, "b1": b1, "w2": w2, "b2": b2, "w3": w3, "b3": b3}


def _reference_forward(x, p):
    h1 = jnp.maximum(x @ p["w1"] + p["b1"], 0.0)
    h2 = jnp.maximum(h1 @ p["w2"] + p["b2"], 0.0)
    h3 = jnp.maximum(h2 @ p["w3"] + p["b3"], 0.0)
    return h3


if __name__ == "__main__":
    key = jax.random.PRNGKey(0)
    k_param, k_x, k_x2 = jax.random.split(key, 3)

    input_size, enc1, enc2, enc_out = 11, 10, 9, 3
    params = init_params(k_param, input_size, enc1, enc2, enc_out)

    # Small batch: single 128-lane tile (single grid step).
    batch = 8
    x = jax.random.normal(k_x, (batch, input_size), jnp.float32)
    out = jax.block_until_ready(critic_net_forward(x, params))
    ref = _reference_forward(x, params)
    assert out.shape == (batch, enc_out), out.shape
    assert jnp.allclose(out, ref, atol=1e-5, rtol=1e-5), "mismatch vs reference (small batch)"

    # Non-multiple batch: exercises the >=2-step streamed grid and lane padding.
    batch2 = 777
    x2 = jax.random.normal(k_x2, (batch2, input_size), jnp.float32)
    out2 = jax.block_until_ready(critic_net_forward(x2, params))
    ref2 = _reference_forward(x2, params)
    assert out2.shape == (batch2, enc_out), out2.shape
    assert jnp.allclose(out2, ref2, atol=1e-5, rtol=1e-5), "mismatch vs reference (gridded batch)"

    print("KERNEL_OK")
</pallas_src>

<mosaic_0001>
module attributes {stable_mosaic.version = 11 : i64} {
  func.func @_critic_kernel(%arg0: i32, %arg1: memref<11x128xf32, #tpu.memory_space<vmem>>, %arg2: memref<10x11xf32, #tpu.memory_space<vmem>>, %arg3: memref<10x1xf32, #tpu.memory_space<vmem>>, %arg4: memref<9x10xf32, #tpu.memory_space<vmem>>, %arg5: memref<9x1xf32, #tpu.memory_space<vmem>>, %arg6: memref<3x9xf32, #tpu.memory_space<vmem>>, %arg7: memref<3x1xf32, #tpu.memory_space<vmem>>, %arg8: memref<3x128xf32, #tpu.memory_space<vmem>>) attributes {dimension_semantics = [#tpu.dimension_semantics<parallel>], iteration_bounds = array<i64: 1>, scalar_prefetch = 0 : i64, scratch_operands = 0 : i64, tpu.core_type = #tpu.core_type<tc>, window_params = [{transform_indices = @transform_0, window_bounds = array<i64: 11, 128>}, {pipeline_mode = #tpu.pipeline_mode<synchronous>, transform_indices = @transform_1, window_bounds = array<i64: 10, 11>}, {pipeline_mode = #tpu.pipeline_mode<synchronous>, transform_indices = @transform_2, window_bounds = array<i64: 10, 1>}, {pipeline_mode = #tpu.pipeline_mode<synchronous>, transform_indices = @transform_3, window_bounds = array<i64: 9, 10>}, {pipeline_mode = #tpu.pipeline_mode<synchronous>, transform_indices = @transform_4, window_bounds = array<i64: 9, 1>}, {pipeline_mode = #tpu.pipeline_mode<synchronous>, transform_indices = @transform_5, window_bounds = array<i64: 3, 9>}, {pipeline_mode = #tpu.pipeline_mode<synchronous>, transform_indices = @transform_6, window_bounds = array<i64: 3, 1>}, {transform_indices = @transform_7, window_bounds = array<i64: 3, 128>}]} {
    %c0 = arith.constant 0 : index
    %c0_0 = arith.constant 0 : index
    %0 = vector.load %arg1[%c0, %c0_0] : memref<11x128xf32, #tpu.memory_space<vmem>>, vector<11x128xf32>
    %c0_1 = arith.constant 0 : index
    %c0_2 = arith.constant 0 : index
    %1 = vector.load %arg2[%c0_1, %c0_2] : memref<10x11xf32, #tpu.memory_space<vmem>>, vector<10x11xf32>
    %cst = arith.constant dense<0.000000e+00> : vector<10x128xf32>
    %2 = tpu.matmul %1, %0, %cst {dimension_numbers = #tpu.dot_dimension_numbers<[1], [0], [0], [1], [0, 0, 1, 1], [], []>} : vector<10x11xf32>, vector<11x128xf32>, vector<10x128xf32> -> vector<10x128xf32>
    %c0_3 = arith.constant 0 : index
    %c0_4 = arith.constant 0 : index
    %3 = vector.load %arg3[%c0_3, %c0_4] : memref<10x1xf32, #tpu.memory_space<vmem>>, vector<10x1xf32>
    %4 = vector.broadcast %3 : vector<10x1xf32> to vector<10x128xf32>
    %5 = arith.addf %2, %4 : vector<10x128xf32>
    %cst_5 = arith.constant 0.000000e+00 : f32
    %6 = vector.broadcast %cst_5 : f32 to vector<10x128xf32>
    %7 = arith.maximumf %5, %6 : vector<10x128xf32>
    %c0_6 = arith.constant 0 : index
    %c0_7 = arith.constant 0 : index
    %8 = vector.load %arg4[%c0_6, %c0_7] : memref<9x10xf32, #tpu.memory_space<vmem>>, vector<9x10xf32>
    %cst_8 = arith.constant dense<0.000000e+00> : vector<9x128xf32>
    %9 = tpu.matmul %8, %7, %cst_8 {dimension_numbers = #tpu.dot_dimension_numbers<[1], [0], [0], [1], [0, 0, 1, 1], [], []>} : vector<9x10xf32>, vector<10x128xf32>, vector<9x128xf32> -> vector<9x128xf32>
    %c0_9 = arith.constant 0 : index
    %c0_10 = arith.constant 0 : index
    %10 = vector.load %arg5[%c0_9, %c0_10] : memref<9x1xf32, #tpu.memory_space<vmem>>, vector<9x1xf32>
    %11 = vector.broadcast %10 : vector<9x1xf32> to vector<9x128xf32>
    %12 = arith.addf %9, %11 : vector<9x128xf32>
    %cst_11 = arith.constant 0.000000e+00 : f32
    %13 = vector.broadcast %cst_11 : f32 to vector<9x128xf32>
    %14 = arith.maximumf %12, %13 : vector<9x128xf32>
    %c0_12 = arith.constant 0 : index
    %c0_13 = arith.constant 0 : index
    %15 = vector.load %arg6[%c0_12, %c0_13] : memref<3x9xf32, #tpu.memory_space<vmem>>, vector<3x9xf32>
    %cst_14 = arith.constant dense<0.000000e+00> : vector<3x128xf32>
    %16 = tpu.matmul %15, %14, %cst_14 {dimension_numbers = #tpu.dot_dimension_numbers<[1], [0], [0], [1], [0, 0, 1, 1], [], []>} : vector<3x9xf32>, vector<9x128xf32>, vector<3x128xf32> -> vector<3x128xf32>
    %c0_15 = arith.constant 0 : index
    %c0_16 = arith.constant 0 : index
    %17 = vector.load %arg7[%c0_15, %c0_16] : memref<3x1xf32, #tpu.memory_space<vmem>>, vector<3x1xf32>
    %18 = vector.broadcast %17 : vector<3x1xf32> to vector<3x128xf32>
    %19 = arith.addf %16, %18 : vector<3x128xf32>
    %cst_17 = arith.constant 0.000000e+00 : f32
    %20 = vector.broadcast %cst_17 : f32 to vector<3x128xf32>
    %21 = arith.maximumf %19, %20 : vector<3x128xf32>
    %c0_18 = arith.constant 0 : index
    %c0_19 = arith.constant 0 : index
    %22 = vector.load %arg8[%c0_18, %c0_19] : memref<3x128xf32, #tpu.memory_space<vmem>>, vector<3x128xf32>
    tpu.vector_store %arg8[%c0_18, %c0_19], %21 {strides = array<i32>} : memref<3x128xf32, #tpu.memory_space<vmem>>, vector<3x128xf32>,
    return
  }
  func.func @transform_0(%arg0: i32) -> (i32, i32) {
    %c0_i32 = arith.constant 0 : i32
    %c0_i32_0 = arith.constant 0 : i32
    return %c0_i32, %arg0 : i32, i32
  }
  func.func @transform_1(%arg0: i32) -> (i32, i32) {
    %c0_i32 = arith.constant 0 : i32
    %c0_i32_0 = arith.constant 0 : i32
    %c0_i32_1 = arith.constant 0 : i32
    return %c0_i32, %c0_i32_0 : i32, i32
  }
  func.func @transform_2(%arg0: i32) -> (i32, i32) {
    %c0_i32 = arith.constant 0 : i32
    %c0_i32_0 = arith.constant 0 : i32
    %c0_i32_1 = arith.constant 0 : i32
    return %c0_i32, %c0_i32_0 : i32, i32
  }
  func.func @transform_3(%arg0: i32) -> (i32, i32) {
    %c0_i32 = arith.constant 0 : i32
    %c0_i32_0 = arith.constant 0 : i32
    %c0_i32_1 = arith.constant 0 : i32
    return %c0_i32, %c0_i32_0 : i32, i32
  }
  func.func @transform_4(%arg0: i32) -> (i32, i32) {
    %c0_i32 = arith.constant 0 : i32
    %c0_i32_0 = arith.constant 0 : i32
    %c0_i32_1 = arith.constant 0 : i32
    return %c0_i32, %c0_i32_0 : i32, i32
  }
  func.func @transform_5(%arg0: i32) -> (i32, i32) {
    %c0_i32 = arith.constant 0 : i32
    %c0_i32_0 = arith.constant 0 : i32
    %c0_i32_1 = arith.constant 0 : i32
    return %c0_i32, %c0_i32_0 : i32, i32
  }
  func.func @transform_6(%arg0: i32) -> (i32, i32) {
    %c0_i32 = arith.constant 0 : i32
    %c0_i32_0 = arith.constant 0 : i32
    %c0_i32_1 = arith.constant 0 : i32
    return %c0_i32, %c0_i32_0 : i32, i32
  }
  func.func @transform_7(%arg0: i32) -> (i32, i32) {
    %c0_i32 = arith.constant 0 : i32
    %c0_i32_0 = arith.constant 0 : i32
    return %c0_i32, %arg0 : i32, i32
  }
}

</mosaic_0001>

<llo_original>
// kernel: critic_net_forward.1
$region0: #{critic_net_forward.1}
  #allocation0 [shape = 'u32[]', space=smem, size = 0x4, offset = 0x4, fixed_abs, tag = 'smem constant byte address 0x4 - core index']
  #allocation1 [shape = 'u32[72,128]{1,0:T(1,128)}', space=vmem, size = 0x9000, scoped, tag = 'internal scratch']
  %s0 = inlined_call_operand.vmem [shape: f32[11,128], index: 0, kind: input, shape index: {}]
  %s1 = inlined_call_operand.vmem [shape: f32[10,11], index: 1, kind: input, shape index: {}]
  %s2 = inlined_call_operand.vmem [shape: f32[10,1], index: 2, kind: input, shape index: {}]
  %s3 = inlined_call_operand.vmem [shape: f32[9,10], index: 3, kind: input, shape index: {}]
  %s4 = inlined_call_operand.vmem [shape: f32[9,1], index: 4, kind: input, shape index: {}]
  %s5 = inlined_call_operand.vmem [shape: f32[3,9], index: 5, kind: input, shape index: {}]
  %s6 = inlined_call_operand.vmem [shape: f32[3,1], index: 6, kind: input, shape index: {}]
  %s7 = inlined_call_operand.vmem [shape: f32[3,128], index: 7, kind: output, shape index: {}]
  %s8 = sld [smem:[#allocation0]]
  $region38: #{critic_net_forward.1} parent=0
    _
  %s10 = ssub.s32 1, %s8
  %s11 = scalar_select 0, %s10, %s8
  // Predicated region
  $region2: #{critic_net_forward.1} parent=0 // pred_check
    _
  $region3: #{critic_net_forward.1} parent=0 // pred_check_branch
    %13 = sbr.rel (0) target = $region5
  $region4: #{critic_net_forward.1} parent=0 // pred_region
    _
  $region5: #{critic_net_forward.1} parent=0 // pred_fallthru
    _
  // Predicated region
  $region6: #{critic_net_forward.1} parent=0 // pred_check
    _
  $region7: #{critic_net_forward.1} parent=0 // pred_check_branch
    %15 = sbr.rel (0) target = $region9
  $region8: #{critic_net_forward.1} parent=0 // pred_region
    _
  $region9: #{critic_net_forward.1} parent=0 // pred_fallthru
    _
  // Predicated region
  $region10: #{critic_net_forward.1} parent=0 // pred_check
    _
  $region11: #{critic_net_forward.1} parent=0 // pred_check_branch
    %17 = sbr.rel (0) target = $region13
  $region12: #{critic_net_forward.1} parent=0 // pred_region
    _
  $region13: #{critic_net_forward.1} parent=0 // pred_fallthru
    _
  // Predicated region
  $region14: #{critic_net_forward.1} parent=0 // pred_check
    _
  $region15: #{critic_net_forward.1} parent=0 // pred_check_branch
    %19 = sbr.rel (0) target = $region17
  $region16: #{critic_net_forward.1} parent=0 // pred_region
    _
  $region17: #{critic_net_forward.1} parent=0 // pred_fallthru
    _
  // Predicated region
  $region18: #{critic_net_forward.1} parent=0 // pred_check
    _
  $region19: #{critic_net_forward.1} parent=0 // pred_check_branch
    %21 = sbr.rel (0) target = $region21
  $region20: #{critic_net_forward.1} parent=0 // pred_region
    _
  $region21: #{critic_net_forward.1} parent=0 // pred_fallthru
    _
  // Predicated region
  $region22: #{critic_net_forward.1} parent=0 // pred_check
    _
  $region23: #{critic_net_forward.1} parent=0 // pred_check_branch
    %23 = sbr.rel (0) target = $region25
  $region24: #{critic_net_forward.1} parent=0 // pred_region
    _
  $region25: #{critic_net_forward.1} parent=0 // pred_fallthru
    _
  // Predicated region
  $region26: #{critic_net_forward.1} parent=0 // pred_check
    _
  $region27: #{critic_net_forward.1} parent=0 // pred_check_branch
    %25 = sbr.rel (0) target = $region29
  $region28: #{critic_net_forward.1} parent=0 // pred_region
    _
  $region29: #{critic_net_forward.1} parent=0 // pred_fallthru
    _
  %v26 = vld [vmem:[%s0] sm:$0xff]
  %v27 = vld [vmem:[%s0 + $0x8] sm:$0x7]
  %v28 = vld [vmem:[%s1] sm:$0xff]
  %v29 = vld [vmem:[%s1 + $0x8] sm:$0x3]
  %v30 = vld [vmem:[%s2] sm:$0xff]
  %v31 = vld [vmem:[%s2 + $0x8] sm:$0x3]
  %33 = vset.pattern.permute.xlu0 0
  %34 = vperm.xlu0 %33, %v30
  %v35 = vpop.permute.xlu0 %34
  %38 = vset.pattern.permute.xlu0 0
  %39 = vperm.xlu0 %38, %v31
  %v40 = vpop.permute.xlu0 %39
  %vm42 = vcmask 89088
  %v44 = vsel %vm42, %v28, 0
  %v47 = vsel %vm42, %v29, 0
  %vm49 = vcmask 1042432
  %v51 = vsel %vm49, %v27, 0
  %53 = vmatpush.msra.mxu0 0.0
  %54 = vmatpush.msra.mxu0 0.0
  %55 = vmatpush.msra.mxu0 0.0
  %56 = vmatpush.msra.mxu0 0.0
  %57 = vmatpush.msra.mxu0 0.0
  %58 = vmatpush.msra.mxu0 0.0
  %59 = vmatpush.msra.mxu0 0.0
  %60 = vmatpush.msra.mxu0 0.0
  %61 = vmatpush.msra.mxu0 0.0
  %62 = vmatpush.msra.mxu0 0.0
  %63 = vmatpush.msra.mxu0 0.0
  %64 = vmatpush.msra.mxu0 0.0
  %65 = vmatpush.msra.mxu0 0.0
  %66 = vmatpush.msra.mxu0 0.0
  %67 = vmatpush.msra.mxu0 %v51
  %68 = vmatpush.msra.mxu0 %v26
  %69 = vmatmul.f32.gmra.mxu0 %v44
  %v70 = vpop.f32.mrf.mxu0
  %v71 = vadd.f32 %v35, %v70
  %72 = vmatmul.f32.gmra.mxu0 %v47
  %v73 = vpop.f32.mrf.mxu0
  %v74 = vadd.f32 %v40, %v73
  %75 = vdwg.mxu0
  %v76 = vmax.f32 %v71, 0.0
  %v77 = vmax.f32 %v74, 0.0
  %v78 = vld [vmem:[%s3] sm:$0xff]
  %v79 = vld [vmem:[%s3 + $0x8] sm:$0x1]
  %v80 = vld [vmem:[%s4] sm:$0xff]
  %v81 = vld [vmem:[%s4 + $0x8] sm:$0x1]
  %83 = vset.pattern.permute.xlu0 0
  %84 = vperm.xlu0 %83, %v80
  %v85 = vpop.permute.xlu0 %84
  %88 = vset.pattern.permute.xlu0 0
  %89 = vperm.xlu0 %88, %v81
  %v90 = vpop.permute.xlu0 %89
  %vm92 = vcmask 80896
  %v94 = vsel %vm92, %v78, 0
  %v97 = vsel %vm92, %v79, 0
  %vm99 = vcmask 1041408
  %v101 = vsel %vm99, %v77, 0
  %103 = vmatpush.msra.mxu0 0.0
  %104 = vmatpush.msra.mxu0 0.0
  %105 = vmatpush.msra.mxu0 0.0
  %106 = vmatpush.msra.mxu0 0.0
  %107 = vmatpush.msra.mxu0 0.0
  %108 = vmatpush.msra.mxu0 0.0
  %109 = vmatpush.msra.mxu0 0.0
  %110 = vmatpush.msra.mxu0 0.0
  %111 = vmatpush.msra.mxu0 0.0
  %112 = vmatpush.msra.mxu0 0.0
  %113 = vmatpush.msra.mxu0 0.0
  %114 = vmatpush.msra.mxu0 0.0
  %115 = vmatpush.msra.mxu0 0.0
  %116 = vmatpush.msra.mxu0 0.0
  %117 = vmatpush.msra.mxu0 %v101
  %118 = vmatpush.msra.mxu0 %v76
  %119 = vmatmul.f32.gmra.mxu0 %v94
  %v120 = vpop.f32.mrf.mxu0
  %v121 = vadd.f32 %v85, %v120
  %122 = vmatmul.f32.gmra.mxu0 %v97
  %v123 = vpop.f32.mrf.mxu0
  %v124 = vadd.f32 %v90, %v123
  %125 = vdwg.mxu0
  %v126 = vmax.f32 %v121, 0.0
  %v127 = vmax.f32 %v124, 0.0
  %v128 = vld [vmem:[%s5] sm:$0x7]
  %v129 = vld [vmem:[%s6] sm:$0x7]
  %131 = vset.pattern.permute.xlu0 0
  %132 = vperm.xlu0 %131, %v129
  %v133 = vpop.permute.xlu0 %132
  %vm135 = vcmask 72704
  %v137 = vsel %vm135, %v128, 0
  %vm139 = vcmask 1040384
  %v141 = vsel %vm139, %v127, 0
  %143 = vmatpush.msra.mxu0 0.0
  %144 = vmatpush.msra.mxu0 0.0
  %145 = vmatpush.msra.mxu0 0.0
  %146 = vmatpush.msra.mxu0 0.0
  %147 = vmatpush.msra.mxu0 0.0
  %148 = vmatpush.msra.mxu0 0.0
  %149 = vmatpush.msra.mxu0 0.0
  %150 = vmatpush.msra.mxu0 0.0
  %151 = vmatpush.msra.mxu0 0.0
  %152 = vmatpush.msra.mxu0 0.0
  %153 = vmatpush.msra.mxu0 0.0
  %154 = vmatpush.msra.mxu0 0.0
  %155 = vmatpush.msra.mxu0 0.0
  %156 = vmatpush.msra.mxu0 0.0
  %157 = vmatpush.msra.mxu0 %v141
  %158 = vmatpush.msra.mxu0 %v126
  %159 = vmatmul.f32.gmra.mxu0 %v137
  %v160 = vpop.f32.mrf.mxu0
  %v161 = vadd.f32 %v133, %v160
  %162 = vdwg.mxu0
  %v163 = vmax.f32 %v161, 0.0
  %164 = vst [vmem:[%s7] sm:$0x7] %v163
  // Predicated region
  $region30: #{critic_net_forward.1} parent=0 // pred_check
    _
  $region31: #{critic_net_forward.1} parent=0 // pred_check_branch
    %166 = sbr.rel (0) target = $region33
  $region32: #{critic_net_forward.1} parent=0 // pred_region
    _
  $region33: #{critic_net_forward.1} parent=0 // pred_fallthru
    _
  // Predicated region
  $region34: #{critic_net_forward.1} parent=0 // pred_check
    _
  $region35: #{critic_net_forward.1} parent=0 // pred_check_branch
    %168 = sbr.rel (0) target = $region37
  $region36: #{critic_net_forward.1} parent=0 // pred_region
    _
  $region37: #{critic_net_forward.1} parent=0 // pred_fallthru
    _

</llo_original>
